<compile_context>
chip_gen: v7x
topology: tpu7x:2x2x1
jax: 0.10.0
libtpu: 0.0.40
codegen_flags: <defaults>
</compile_context>

<pallas_src>
import functools

import jax
import jax.numpy as jnp
from jax import lax
from jax.experimental import pallas as pl
from jax.experimental.pallas import tpu as pltpu


# ----------------------------- Pallas kernel ------------------------------ #
def _nonlocal_kernel(x_ref,       # (1, 4*Np, C) f32  tokens in window-offset order
                     w_all_ref,   # (C, 3*Ci) bf16    fused [theta | phi | g] 1x1 convs
                     b_all_ref,   # (1, 3*Ci) f32     fused biases
                     wf_ref,      # (Ci, C)  bf16     W 1x1 conv with BN folded in
                     bf_ref,      # (1, C)   f32      folded bias
                     out_ref,     # (1, tq, C)
                     theta_s,     # (4*Np, Ci) bf16 scratch
                     phi_s,       # (Np, Ci)   bf16 scratch
                     g_s,         # (Np, Ci)   bf16 scratch
                     *, Ci, Np, tq):
    q = pl.program_id(1)

    # ---- per-batch prologue (runs once per batch element): fused projections ----
    @pl.when(q == 0)
    def _():
        x_all = x_ref[0].astype(jnp.bfloat16)                        # (4Np, C)
        proj = jnp.dot(x_all, w_all_ref[...],
                       preferred_element_type=jnp.float32)           # (4Np, 3Ci) f32
        proj = proj + b_all_ref[...]          # bias before pooling is equivalent
        theta_s[...] = proj[:, 0:Ci].astype(jnp.bfloat16)
        # MaxPool2d(2,2) after a 1x1 conv == elementwise max over the 4 window
        # offsets; rows of proj are grouped as [offset k][Np tokens].
        pg = proj[0:Np, Ci:3 * Ci]
        for k in range(1, 4):
            pg = jnp.maximum(pg, proj[k * Np:(k + 1) * Np, Ci:3 * Ci])
        phi_s[...] = pg[:, 0:Ci].astype(jnp.bfloat16)                # (Np, Ci)
        g_s[...] = pg[:, Ci:2 * Ci].astype(jnp.bfloat16)             # (Np, Ci)

    # ---- per-query-tile attention ----
    qstart = pl.multiple_of(q * tq, tq)
    theta_t = theta_s[pl.ds(qstart, tq), :]                          # (tq, Ci) bf16

    # f = theta @ phi^T  (contract Ci; trans_b form, no explicit transpose of phi)
    f = lax.dot_general(theta_t, phi_s[...], (((1,), (1,)), ((), ())),
                        preferred_element_type=jnp.float32)          # (tq, Np) f32

    m = jnp.max(f, axis=-1, keepdims=True)
    e = jnp.exp(f - m)
    attn = e * pl.reciprocal(jnp.sum(e, axis=-1, keepdims=True), approx=True)

    y = jnp.dot(attn.astype(jnp.bfloat16), g_s[...],
                preferred_element_type=jnp.float32)                  # (tq, Ci) f32
    wy = jnp.dot(y.astype(jnp.bfloat16), wf_ref[...],
                 preferred_element_type=jnp.float32) + bf_ref[...]   # (tq, C) f32

    x_t = x_ref[0, pl.ds(qstart, tq), :]                             # (tq, C) f32
    out_ref[0, :, :] = (wy + x_t).astype(out_ref.dtype)


# ------------------------------- Wrapper ----------------------------------- #
def nonlocal_block_pallas(x, p, *, tq=128):
    """x: (B, C, H, W) float32, NCHW like the PyTorch module."""
    B, C, H, W = x.shape
    Ci = p["w_theta"].shape[0]
    assert H % 2 == 0 and W % 2 == 0, "2x2 max-pool path assumes even H, W"
    Hp, Wp = H // 2, W // 2
    Np = Hp * Wp
    Nf = 4 * Np                                   # total tokens (= H*W)
    if Nf % tq != 0:
        tq = Nf   # TODO(synk): ragged query tiles for token counts not % 128

    # Layout glue (plain JAX): NCHW -> window-offset-ordered token matrix.
    # Row order: k = dy*2 + dx (offset in the 2x2 window), then p = hp*Wp + wp.
    x_nhwc = jnp.transpose(x, (0, 2, 3, 1))                           # (B,H,W,C)
    x_win = (x_nhwc.reshape(B, Hp, 2, Wp, 2, C)
             .transpose(0, 2, 4, 1, 3, 5)
             .reshape(B, Nf, C))

    # Fuse the three 1x1 convs into a single (C, 3*Ci) weight (bf16 for the MXU).
    w_all = jnp.concatenate(
        [p["w_theta"].T, p["w_phi"].T, p["w_g"].T], axis=1).astype(jnp.bfloat16)
    b_all = jnp.concatenate(
        [p["b_theta"], p["b_phi"], p["b_g"]]).reshape(1, 3 * Ci).astype(jnp.float32)

    # Fold eval-mode BatchNorm2d into the W 1x1 conv.
    scale = p["bn_gamma"] / jnp.sqrt(p["bn_var"] + 1e-5)
    w_fold = (p["w_w"] * scale[:, None]).T.astype(jnp.bfloat16)       # (Ci, C)
    b_fold = (p["b_w"] * scale + p["bn_beta"]
              - p["bn_mean"] * scale).reshape(1, C).astype(jnp.float32)

    def full(shape):
        return pl.BlockSpec(shape, lambda b, q: (0,) * len(shape))

    grid_spec = pltpu.PrefetchScalarGridSpec(
        num_scalar_prefetch=0,
        grid=(B, Nf // tq),
        in_specs=[
            # constant block index across q -> stays VMEM-resident per batch
            pl.BlockSpec((1, Nf, C), lambda b, q: (b, 0, 0)),
            full((C, 3 * Ci)), full((1, 3 * Ci)),
            full((Ci, C)), full((1, C)),
        ],
        out_specs=pl.BlockSpec((1, tq, C), lambda b, q: (b, q, 0)),
        scratch_shapes=[
            pltpu.VMEM((Nf, Ci), jnp.bfloat16),   # theta for all tokens
            pltpu.VMEM((Np, Ci), jnp.bfloat16),   # pooled phi
            pltpu.VMEM((Np, Ci), jnp.bfloat16),   # pooled g
        ],
    )

    out_tok = pl.pallas_call(
        functools.partial(_nonlocal_kernel, Ci=Ci, Np=Np, tq=tq),
        out_shape=jax.ShapeDtypeStruct((B, Nf, C), x.dtype),
        grid_spec=grid_spec,
        compiler_params=pltpu.CompilerParams(
            dimension_semantics=("parallel", "arbitrary"),
            vmem_limit_bytes=48 * 1024 * 1024),
    )(x_win, w_all, b_all, w_fold, b_fold)

    # Inverse window permutation, absorbed into the output reshape/transpose.
    z = (out_tok.reshape(B, 2, 2, Hp, Wp, C)
         .transpose(0, 3, 1, 4, 2, 5)
         .reshape(B, H, W, C)
         .transpose(0, 3, 1, 2))                                      # (B,C,H,W)
    return z


# ------------------ Pure-JAX reference (mirrors PyTorch forward) ------------ #
def nonlocal_block_reference(x, p):
    B, C, H, W = x.shape
    Ci = p["w_theta"].shape[0]
    hi = jax.lax.Precision.HIGHEST

    def conv1x1(inp, w, b):  # inp (B,Cin,H,W), w (Cout,Cin), b (Cout,)
        out = jnp.einsum("oc,bchw->bohw", w, inp, precision=hi)
        return out + b[None, :, None, None]

    def maxpool2x2(inp):
        return lax.reduce_window(inp, -jnp.inf, lax.max,
                                 (1, 1, 2, 2), (1, 1, 2, 2), "VALID")

    g = maxpool2x2(conv1x1(x, p["w_g"], p["b_g"]))
    theta = conv1x1(x, p["w_theta"], p["b_theta"])
    phi = maxpool2x2(conv1x1(x, p["w_phi"], p["b_phi"]))

    g_x = g.reshape(B, Ci, -1).transpose(0, 2, 1)          # (B, Np, Ci)
    theta_x = theta.reshape(B, Ci, -1).transpose(0, 2, 1)  # (B, N, Ci)
    phi_x = phi.reshape(B, Ci, -1)                         # (B, Ci, Np)

    f = jnp.einsum("bnc,bcm->bnm", theta_x, phi_x, precision=hi)
    f_div_c = jax.nn.softmax(f, axis=-1)
    y = jnp.einsum("bnm,bmc->bnc", f_div_c, g_x, precision=hi)
    y = y.transpose(0, 2, 1).reshape(B, Ci, H, W)

    wy = conv1x1(y, p["w_w"], p["b_w"])
    scale = p["bn_gamma"] / jnp.sqrt(p["bn_var"] + 1e-5)
    wy = (wy * scale[None, :, None, None]
          + (p["bn_beta"] - p["bn_mean"] * scale)[None, :, None, None])
    return wy + x


# --------------------------------- Main ------------------------------------ #
if __name__ == "__main__":
    B, C, H, W = 2, 4, 16, 16
    Ci = C // 2                      # inter_channels = in_channels // 2

    key = jax.random.PRNGKey(0)
    ks = jax.random.split(key, 13)
    x = jax.random.normal(ks[0], (B, C, H, W), jnp.float32)

    # Deterministic synthetic parameters (shapes from __init__).
    # NOTE: the original __init__ zero-inits the BN affine (identity residual);
    # nonzero deterministic values are used so the whole path is exercised.
    params = {
        "w_theta": 0.3 * jax.random.normal(ks[1], (Ci, C), jnp.float32),
        "b_theta": 0.1 * jax.random.normal(ks[2], (Ci,), jnp.float32),
        "w_phi":   0.3 * jax.random.normal(ks[3], (Ci, C), jnp.float32),
        "b_phi":   0.1 * jax.random.normal(ks[4], (Ci,), jnp.float32),
        "w_g":     0.3 * jax.random.normal(ks[5], (Ci, C), jnp.float32),
        "b_g":     0.1 * jax.random.normal(ks[6], (Ci,), jnp.float32),
        "w_w":     0.3 * jax.random.normal(ks[7], (C, Ci), jnp.float32),
        "b_w":     0.1 * jax.random.normal(ks[8], (C,), jnp.float32),
        "bn_gamma": 1.0 + 0.1 * jax.random.normal(ks[9], (C,), jnp.float32),
        "bn_beta":  0.1 * jax.random.normal(ks[10], (C,), jnp.float32),
        "bn_mean":  0.1 * jax.random.normal(ks[11], (C,), jnp.float32),
        "bn_var":   0.5 + jax.random.uniform(ks[12], (C,), jnp.float32),
    }

    z = nonlocal_block_pallas(x, params)
    jax.block_until_ready(z)

    z_ref = nonlocal_block_reference(x, params)
    assert z.shape == x.shape
    # Tolerance sized for bf16 MXU operands (f32 accumulation) + approx reciprocal.
    max_err = float(jnp.max(jnp.abs(z - z_ref)))
    assert max_err < 5e-2, f"mismatch vs reference: {max_err}"

    print("KERNEL_OK")
</pallas_src>

<mosaic_0001>
module attributes {stable_mosaic.version = 11 : i64} {
  func.func @_nonlocal_kernel(%arg0: i32, %arg1: i32, %arg2: memref<1x256x4xf32, #tpu.memory_space<vmem>>, %arg3: memref<4x6xbf16, #tpu.memory_space<vmem>>, %arg4: memref<1x6xf32, #tpu.memory_space<vmem>>, %arg5: memref<2x4xbf16, #tpu.memory_space<vmem>>, %arg6: memref<1x4xf32, #tpu.memory_space<vmem>>, %arg7: memref<1x128x4xf32, #tpu.memory_space<vmem>>, %arg8: memref<256x2xbf16, #tpu.memory_space<vmem>>, %arg9: memref<64x2xbf16, #tpu.memory_space<vmem>>, %arg10: memref<64x2xbf16, #tpu.memory_space<vmem>>) attributes {dimension_semantics = [#tpu.dimension_semantics<parallel>, #tpu.dimension_semantics<arbitrary>], iteration_bounds = array<i64: 2, 2>, scalar_prefetch = 0 : i64, scratch_operands = 3 : i64, tpu.core_type = #tpu.core_type<tc>, window_params = [{transform_indices = @transform_0, window_bounds = array<i64: 1, 256, 4>}, {pipeline_mode = #tpu.pipeline_mode<synchronous>, transform_indices = @transform_1, window_bounds = array<i64: 4, 6>}, {pipeline_mode = #tpu.pipeline_mode<synchronous>, transform_indices = @transform_2, window_bounds = array<i64: 1, 6>}, {pipeline_mode = #tpu.pipeline_mode<synchronous>, transform_indices = @transform_3, window_bounds = array<i64: 2, 4>}, {pipeline_mode = #tpu.pipeline_mode<synchronous>, transform_indices = @transform_4, window_bounds = array<i64: 1, 4>}, {transform_indices = @transform_5, window_bounds = array<i64: 1, 128, 4>}]} {
    %c0_i32 = arith.constant 0 : i32
    %0 = arith.cmpi eq, %arg1, %c0_i32 : i32
    %1 = arith.extui %0 : i1 to i32
    %c0_i32_0 = arith.constant 0 : i32
    %2 = arith.cmpi ne, %1, %c0_i32_0 : i32
    scf.if %2 {
      %c0_18 = arith.constant 0 : index
      %c0_19 = arith.constant 0 : index
      %c0_20 = arith.constant 0 : index
      %35 = vector.load %arg2[%c0_18, %c0_19, %c0_20] : memref<1x256x4xf32, #tpu.memory_space<vmem>>, vector<1x256x4xf32>
      %36 = vector.shape_cast %35 : vector<1x256x4xf32> to vector<256x4xf32>
      %37 = arith.truncf %36 : vector<256x4xf32> to vector<256x4xbf16>
      %c0_21 = arith.constant 0 : index
      %c0_22 = arith.constant 0 : index
      %38 = vector.load %arg3[%c0_21, %c0_22] : memref<4x6xbf16, #tpu.memory_space<vmem>>, vector<4x6xbf16>
      %cst_23 = arith.constant dense<0.000000e+00> : vector<256x6xf32>
      %39 = tpu.matmul %37, %38, %cst_23 {dimension_numbers = #tpu.dot_dimension_numbers<[1], [0], [0], [1], [0, 0, 1, 1], [], []>} : vector<256x4xbf16>, vector<4x6xbf16>, vector<256x6xf32> -> vector<256x6xf32>
      %c0_24 = arith.constant 0 : index
      %c0_25 = arith.constant 0 : index
      %40 = vector.load %arg4[%c0_24, %c0_25] : memref<1x6xf32, #tpu.memory_space<vmem>>, vector<1x6xf32>
      %41 = vector.broadcast %40 : vector<1x6xf32> to vector<256x6xf32>
      %42 = arith.addf %39, %41 : vector<256x6xf32>
      %43 = vector.extract_strided_slice %42 {offsets = [0, 0], sizes = [256, 2], strides = [1, 1]} : vector<256x6xf32> to vector<256x2xf32>
      %44 = arith.truncf %43 : vector<256x2xf32> to vector<256x2xbf16>
      %c0_26 = arith.constant 0 : index
      %c0_27 = arith.constant 0 : index
      %45 = vector.load %arg8[%c0_26, %c0_27] : memref<256x2xbf16, #tpu.memory_space<vmem>>, vector<256x2xbf16>
      tpu.vector_store %arg8[%c0_26, %c0_27], %44 {strides = array<i32>} : memref<256x2xbf16, #tpu.memory_space<vmem>>, vector<256x2xbf16>,
      %46 = vector.extract_strided_slice %42 {offsets = [0, 2], sizes = [64, 4], strides = [1, 1]} : vector<256x6xf32> to vector<64x4xf32>
      %47 = vector.extract_strided_slice %42 {offsets = [64, 2], sizes = [64, 4], strides = [1, 1]} : vector<256x6xf32> to vector<64x4xf32>
      %48 = arith.maximumf %46, %47 : vector<64x4xf32>
      %49 = vector.extract_strided_slice %42 {offsets = [128, 2], sizes = [64, 4], strides = [1, 1]} : vector<256x6xf32> to vector<64x4xf32>
      %50 = arith.maximumf %48, %49 : vector<64x4xf32>
      %51 = vector.extract_strided_slice %42 {offsets = [192, 2], sizes = [64, 4], strides = [1, 1]} : vector<256x6xf32> to vector<64x4xf32>
      %52 = arith.maximumf %50, %51 : vector<64x4xf32>
      %53 = vector.extract_strided_slice %52 {offsets = [0, 0], sizes = [64, 2], strides = [1, 1]} : vector<64x4xf32> to vector<64x2xf32>
      %54 = arith.truncf %53 : vector<64x2xf32> to vector<64x2xbf16>
      %c0_28 = arith.constant 0 : index
      %c0_29 = arith.constant 0 : index
      %55 = vector.load %arg9[%c0_28, %c0_29] : memref<64x2xbf16, #tpu.memory_space<vmem>>, vector<64x2xbf16>
      tpu.vector_store %arg9[%c0_28, %c0_29], %54 {strides = array<i32>} : memref<64x2xbf16, #tpu.memory_space<vmem>>, vector<64x2xbf16>,
      %56 = vector.extract_strided_slice %52 {offsets = [0, 2], sizes = [64, 2], strides = [1, 1]} : vector<64x4xf32> to vector<64x2xf32>
      %57 = arith.truncf %56 : vector<64x2xf32> to vector<64x2xbf16>
      %c0_30 = arith.constant 0 : index
      %c0_31 = arith.constant 0 : index
      %58 = vector.load %arg10[%c0_30, %c0_31] : memref<64x2xbf16, #tpu.memory_space<vmem>>, vector<64x2xbf16>
      tpu.vector_store %arg10[%c0_30, %c0_31], %57 {strides = array<i32>} : memref<64x2xbf16, #tpu.memory_space<vmem>>, vector<64x2xbf16>,
    } else {
    }
    %c128_i32 = arith.constant 128 : i32
    %3 = arith.muli %arg1, %c128_i32 : i32
    %4 = tpu.assume_multiple %3, 128 : i32
    %5 = arith.index_cast %4 : i32 to index
    %c0 = arith.constant 0 : index
    %6 = vector.load %arg8[%5, %c0] : memref<256x2xbf16, #tpu.memory_space<vmem>>, vector<128x2xbf16>
    %c0_1 = arith.constant 0 : index
    %c0_2 = arith.constant 0 : index
    %7 = vector.load %arg9[%c0_1, %c0_2] : memref<64x2xbf16, #tpu.memory_space<vmem>>, vector<64x2xbf16>
    %cst = arith.constant dense<0.000000e+00> : vector<128x64xf32>
    %8 = tpu.matmul %6, %7, %cst {dimension_numbers = #tpu.dot_dimension_numbers<[1], [1], [0], [0], [0, 0, 1, 0], [], []>} : vector<128x2xbf16>, vector<64x2xbf16>, vector<128x64xf32> -> vector<128x64xf32>
    %cst_3 = arith.constant dense<0xFF800000> : vector<128xf32>
    %9 = vector.multi_reduction <maximumf>, %8, %cst_3 [1] : vector<128x64xf32> to vector<128xf32>
    %10 = vector.shape_cast %9 : vector<128xf32> to vector<128x1xf32>
    %11 = vector.broadcast %10 : vector<128x1xf32> to vector<128x64xf32>
    %12 = arith.subf %8, %11 : vector<128x64xf32>
    %13 = math.exp %12 : vector<128x64xf32>
    %cst_4 = arith.constant dense<0.000000e+00> : vector<128xf32>
    %14 = vector.multi_reduction <add>, %13, %cst_4 [1] : vector<128x64xf32> to vector<128xf32>
    %15 = vector.shape_cast %14 : vector<128xf32> to vector<128x1xf32>
    %16 = tpu.reciprocal %15 {approx = true} : vector<128x1xf32> -> vector<128x1xf32>
    %17 = vector.broadcast %16 : vector<128x1xf32> to vector<128x64xf32>
    %18 = arith.mulf %13, %17 : vector<128x64xf32>
    %19 = arith.truncf %18 : vector<128x64xf32> to vector<128x64xbf16>
    %c0_5 = arith.constant 0 : index
    %c0_6 = arith.constant 0 : index
    %20 = vector.load %arg10[%c0_5, %c0_6] : memref<64x2xbf16, #tpu.memory_space<vmem>>, vector<64x2xbf16>
    %cst_7 = arith.constant dense<0.000000e+00> : vector<128x2xf32>
    %21 = tpu.matmul %19, %20, %cst_7 {dimension_numbers = #tpu.dot_dimension_numbers<[1], [0], [0], [1], [0, 0, 1, 1], [], []>} : vector<128x64xbf16>, vector<64x2xbf16>, vector<128x2xf32> -> vector<128x2xf32>
    %22 = arith.truncf %21 : vector<128x2xf32> to vector<128x2xbf16>
    %c0_8 = arith.constant 0 : index
    %c0_9 = arith.constant 0 : index
    %23 = vector.load %arg5[%c0_8, %c0_9] : memref<2x4xbf16, #tpu.memory_space<vmem>>, vector<2x4xbf16>
    %cst_10 = arith.constant dense<0.000000e+00> : vector<128x4xf32>
    %24 = tpu.matmul %22, %23, %cst_10 {dimension_numbers = #tpu.dot_dimension_numbers<[1], [0], [0], [1], [0, 0, 1, 1], [], []>} : vector<128x2xbf16>, vector<2x4xbf16>, vector<128x4xf32> -> vector<128x4xf32>
    %c0_11 = arith.constant 0 : index
    %c0_12 = arith.constant 0 : index
    %25 = vector.load %arg6[%c0_11, %c0_12] : memref<1x4xf32, #tpu.memory_space<vmem>>, vector<1x4xf32>
    %26 = vector.broadcast %25 : vector<1x4xf32> to vector<128x4xf32>
    %27 = arith.addf %24, %26 : vector<128x4xf32>
    %c0_13 = arith.constant 0 : index
    %28 = arith.index_cast %4 : i32 to index
    %c0_14 = arith.constant 0 : index
    %29 = vector.load %arg2[%c0_13, %28, %c0_14] : memref<1x256x4xf32, #tpu.memory_space<vmem>>, vector<1x128x4xf32>
    %30 = vector.shape_cast %29 : vector<1x128x4xf32> to vector<128x4xf32>
    %31 = arith.addf %27, %30 : vector<128x4xf32>
    %c0_15 = arith.constant 0 : index
    %c0_16 = arith.constant 0 : index
    %c0_17 = arith.constant 0 : index
    %32 = vector.load %arg7[%c0_15, %c0_16, %c0_17] : memref<1x128x4xf32, #tpu.memory_space<vmem>>, vector<1x128x4xf32>
    %33 = vector.shape_cast %32 : vector<1x128x4xf32> to vector<128x4xf32>
    %34 = vector.shape_cast %31 : vector<128x4xf32> to vector<1x128x4xf32>
    tpu.vector_store %arg7[%c0_15, %c0_16, %c0_17], %34 {strides = array<i32>} : memref<1x128x4xf32, #tpu.memory_space<vmem>>, vector<1x128x4xf32>,
    return
  }
  func.func @transform_0(%arg0: i32, %arg1: i32) -> (i32, i32, i32) {
    %c0_i32 = arith.constant 0 : i32
    %c0_i32_0 = arith.constant 0 : i32
    %c0_i32_1 = arith.constant 0 : i32
    return %arg0, %c0_i32, %c0_i32_0 : i32, i32, i32
  }
  func.func @transform_1(%arg0: i32, %arg1: i32) -> (i32, i32) {
    %c0_i32 = arith.constant 0 : i32
    %c0_i32_0 = arith.constant 0 : i32
    %c0_i32_1 = arith.constant 0 : i32
    return %c0_i32, %c0_i32_0 : i32, i32
  }
  func.func @transform_2(%arg0: i32, %arg1: i32) -> (i32, i32) {
    %c0_i32 = arith.constant 0 : i32
    %c0_i32_0 = arith.constant 0 : i32
    %c0_i32_1 = arith.constant 0 : i32
    return %c0_i32, %c0_i32_0 : i32, i32
  }
  func.func @transform_3(%arg0: i32, %arg1: i32) -> (i32, i32) {
    %c0_i32 = arith.constant 0 : i32
    %c0_i32_0 = arith.constant 0 : i32
    %c0_i32_1 = arith.constant 0 : i32
    return %c0_i32, %c0_i32_0 : i32, i32
  }
  func.func @transform_4(%arg0: i32, %arg1: i32) -> (i32, i32) {
    %c0_i32 = arith.constant 0 : i32
    %c0_i32_0 = arith.constant 0 : i32
    %c0_i32_1 = arith.constant 0 : i32
    return %c0_i32, %c0_i32_0 : i32, i32
  }
  func.func @transform_5(%arg0: i32, %arg1: i32) -> (i32, i32, i32) {
    %c0_i32 = arith.constant 0 : i32
    %c0_i32_0 = arith.constant 0 : i32
    return %arg0, %arg1, %c0_i32 : i32, i32, i32
  }
}

</mosaic_0001>

<llo_original>
// kernel: tpu_custom_call.1
$region0: #{tpu_custom_call.1}
  #allocation0 [shape = 'u32[]', space=smem, size = 0x4, offset = 0x4, fixed_abs, tag = 'smem constant byte address 0x4 - core index']
  #allocation1 [shape = 'u32[144,128]{1,0:T(1,128)}', space=vmem, size = 0x12000, scoped, tag = 'internal scratch']
  #allocation2 [shape = 'bf16[256,2]{1,0:T(16,128)(2,1)}', space=vmem, size = 0x10000, scoped, tag = 'scratch operand']
  #allocation3 [shape = 'bf16[64,2]{1,0:T(16,128)(2,1)}', space=vmem, size = 0x4000, scoped, tag = 'scratch operand']
  #allocation4 [shape = 'bf16[64,2]{1,0:T(16,128)(2,1)}', space=vmem, size = 0x4000, scoped, tag = 'scratch operand']
  %s0 = inlined_call_operand.vmem [shape: f32[2,256,4], index: 0, kind: input, shape index: {}]
  %s1 = inlined_call_operand.vmem [shape: bf16[4,6], index: 1, kind: input, shape index: {}]
  %s2 = inlined_call_operand.vmem [shape: f32[1,6], index: 2, kind: input, shape index: {}]
  %s3 = inlined_call_operand.vmem [shape: bf16[2,4], index: 3, kind: input, shape index: {}]
  %s4 = inlined_call_operand.vmem [shape: f32[1,4], index: 4, kind: input, shape index: {}]
  %s5 = inlined_call_operand.vmem [shape: f32[2,256,4], index: 5, kind: output, shape index: {}]
  %s6 = sld [smem:[#allocation0]]
  $region57: #{tpu_custom_call.1} parent=0
    _
  %s8 = ssub.s32 1, %s6
  %s9 = scalar_select 0, %s8, %s6
  loop: start=0, step=1, limit=6
  $region2: #{tpu_custom_call.1} parent=0 // loop_pre_header
    _
  $region3: #{tpu_custom_call.1} parent=0 // loop_header
    %s11 = sphi 0, %s15
    %p12 = scmp.ge.s32.totalorder %s11, 6
    %s18 = sphi 0, %s30
    %s19 = sphi 0, %s26
    %s20 = sphi 0, %s18
    %s21 = sphi 0, %s19
    %s22 = sphi 0, %s20
    %s23 = sphi 0, %s21
    %s33 = sphi 0, %s35
    %s36 = sphi 0, %s33
    %s37 = sphi 0, %s36
    %s53 = sphi 0, %s37
    %s57 = sphi 0, %s57
    %s59 = sphi 0, %s57
    %s60 = sphi 0, %s59
    %s74 = sphi 0, %s60
    %s78 = sphi 0, %s78
    %s80 = sphi 0, %s78
    %s81 = sphi 0, %s80
    %s95 = sphi 0, %s81
    %s99 = sphi 0, %s99
    %s101 = sphi 0, %s99
    %s102 = sphi 0, %s101
    %s116 = sphi 0, %s102
    %s120 = sphi 0, %s120
    %s122 = sphi 0, %s120
    %s123 = sphi 0, %s122
    %s137 = sphi 0, %s123
    %s145 = sphi 0, %s147
    %s148 = sphi 0, %s145
    %s149 = sphi 0, %s148
    %s165 = sphi 0, %s149
  $region4: #{tpu_custom_call.1} parent=0 // loop_header_branch
    %14 = sbr.rel (%p12) target = $region8
  $region5: #{tpu_custom_call.1} parent=0 // loop_body
    %s16 = ssub.s32 %s11, 1
    %s17 = ssub.s32 %s11, 2
    %s24 = sadd.s32 1, %s19
    %p25 = scmp.ge.s32.totalorder %s24, 2
    %s26 = scalar_select %p25, 0, %s24
    %s27 = sadd.s32 1, %s18
    %s28 = scalar_select %p25, %s27, %s18
    %p29 = scmp.ge.s32.totalorder %s28, 2
    %s30 = scalar_select %p29, 0, %s28
    %s31 = ssub.s32 %s18, %s30
    %p32 = scmp.eq.s32.totalorder %s31, 0
    %s34 = sadd.s32 %s33, 1
    %s35 = scalar_select %p32, %s33, %s34
    %p38 = pneg %p32
    %p39 = scmp.eq.s32.totalorder %s11, 3
    %p40 = por %p38, %p39
    %p41 = scmp.ne.s32.totalorder %s33, %s36
    %p42 = scmp.eq.s32.totalorder %s11, 0
    %p43 = por %p41, %p42
    %p44 = scmp.ne.s32.totalorder %s33, %s36
    %p45 = scmp.eq.s32.totalorder %s16, 3
    %p46 = por %p44, %p45
    %p47 = scmp.ne.s32.totalorder %s36, %s37
    %p48 = scmp.eq.s32.totalorder %s16, 0
    %p49 = por %p47, %p48
    %p50 = scmp.ne.s32.totalorder %s36, %s37
    %p51 = scmp.eq.s32.totalorder %s17, 3
    %p52 = por %p50, %p51
    %p54 = scmp.ne.s32.totalorder %s37, %s53
    %p55 = scmp.eq.s32.totalorder %s17, 0
    %p56 = por %p54, %p55
    %s58 = sadd.s32 %s57, 1
    %p61 = scmp.eq.s32.totalorder %s11, 3
    %p62 = scmp.ne.s32.totalorder %s57, %s59
    %p63 = scmp.eq.s32.totalorder %s11, 0
    %p64 = por %p62, %p63
    %p65 = scmp.ne.s32.totalorder %s57, %s59
    %p66 = scmp.eq.s32.totalorder %s16, 3
    %p67 = por %p65, %p66
    %p68 = scmp.ne.s32.totalorder %s59, %s60
    %p69 = scmp.eq.s32.totalorder %s16, 0
    %p70 = por %p68, %p69
    %p71 = scmp.ne.s32.totalorder %s59, %s60
    %p72 = scmp.eq.s32.totalorder %s17, 3
    %p73 = por %p71, %p72
    %p75 = scmp.ne.s32.totalorder %s60, %s74
    %p76 = scmp.eq.s32.totalorder %s17, 0
    %p77 = por %p75, %p76
    %s79 = sadd.s32 %s78, 1
    %p82 = scmp.eq.s32.totalorder %s11, 3
    %p83 = scmp.ne.s32.totalorder %s78, %s80
    %p84 = scmp.eq.s32.totalorder %s11, 0
    %p85 = por %p83, %p84
    %p86 = scmp.ne.s32.totalorder %s78, %s80
    %p87 = scmp.eq.s32.totalorder %s16, 3
    %p88 = por %p86, %p87
    %p89 = scmp.ne.s32.totalorder %s80, %s81
    %p90 = scmp.eq.s32.totalorder %s16, 0
    %p91 = por %p89, %p90
    %p92 = scmp.ne.s32.totalorder %s80, %s81
    %p93 = scmp.eq.s32.totalorder %s17, 3
    %p94 = por %p92, %p93
    %p96 = scmp.ne.s32.totalorder %s81, %s95
    %p97 = scmp.eq.s32.totalorder %s17, 0
    %p98 = por %p96, %p97
    %s100 = sadd.s32 %s99, 1
    %p103 = scmp.eq.s32.totalorder %s11, 3
    %p104 = scmp.ne.s32.totalorder %s99, %s101
    %p105 = scmp.eq.s32.totalorder %s11, 0
    %p106 = por %p104, %p105
    %p107 = scmp.ne.s32.totalorder %s99, %s101
    %p108 = scmp.eq.s32.totalorder %s16, 3
    %p109 = por %p107, %p108
    %p110 = scmp.ne.s32.totalorder %s101, %s102
    %p111 = scmp.eq.s32.totalorder %s16, 0
    %p112 = por %p110, %p111
    %p113 = scmp.ne.s32.totalorder %s101, %s102
    %p114 = scmp.eq.s32.totalorder %s17, 3
    %p115 = por %p113, %p114
    %p117 = scmp.ne.s32.totalorder %s102, %s116
    %p118 = scmp.eq.s32.totalorder %s17, 0
    %p119 = por %p117, %p118
    %s121 = sadd.s32 %s120, 1
    %p124 = scmp.eq.s32.totalorder %s11, 3
    %p125 = scmp.ne.s32.totalorder %s120, %s122
    %p126 = scmp.eq.s32.totalorder %s11, 0
    %p127 = por %p125, %p126
    %p128 = scmp.ne.s32.totalorder %s120, %s122
    %p129 = scmp.eq.s32.totalorder %s16, 3
    %p130 = por %p128, %p129
    %p131 = scmp.ne.s32.totalorder %s122, %s123
    %p132 = scmp.eq.s32.totalorder %s16, 0
    %p133 = por %p131, %p132
    %p134 = scmp.ne.s32.totalorder %s122, %s123
    %p135 = scmp.eq.s32.totalorder %s17, 3
    %p136 = por %p134, %p135
    %p138 = scmp.ne.s32.totalorder %s123, %s137
    %p139 = scmp.eq.s32.totalorder %s17, 0
    %p140 = por %p138, %p139
    %s141 = ssub.s32 %s18, %s30
    %s142 = ssub.s32 %s19, %s26
    %s143 = sor.u32 %s141, %s142
    %p144 = scmp.eq.s32.totalorder %s143, 0
    %s146 = sadd.s32 %s145, 1
    %s147 = scalar_select %p144, %s145, %s146
    %p150 = pneg %p144
    %p151 = scmp.eq.s32.totalorder %s11, 3
    %p152 = por %p150, %p151
    %p153 = scmp.ne.s32.totalorder %s145, %s148
    %p154 = scmp.eq.s32.totalorder %s11, 0
    %p155 = por %p153, %p154
    %p156 = scmp.ne.s32.totalorder %s145, %s148
    %p157 = scmp.eq.s32.totalorder %s16, 3
    %p158 = por %p156, %p157
    %p159 = scmp.ne.s32.totalorder %s148, %s149
    %p160 = scmp.eq.s32.totalorder %s16, 0
    %p161 = por %p159, %p160
    %p162 = scmp.ne.s32.totalorder %s148, %s149
    %p163 = scmp.eq.s32.totalorder %s17, 3
    %p164 = por %p162, %p163
    %p166 = scmp.ne.s32.totalorder %s149, %s165
    %p167 = scmp.eq.s32.totalorder %s17, 0
    %p168 = por %p166, %p167
    %p169 = scmp.le.s32.totalorder 1, %s11
    %p170 = scmp.lt.s32.totalorder %s11, 5
    %p171 = pnand %p169, %p170
    %p172 = pneg %p171
    // Predicated region
    $region9: #{tpu_custom_call.1} parent=5 // pred_check
      _
    $region10: #{tpu_custom_call.1} parent=5 // pred_check_branch
      %174 = sbr.rel (%p171) target = $region12
    $region11: #{tpu_custom_call.1} parent=5 // pred_region
      %s175 = ssub.s32 %s11, 1
      // Predicated region
      $region13: #{tpu_custom_call.1} parent=11 // pred_check
        %p176 = pneg %p70
      $region14: #{tpu_custom_call.1} parent=11 // pred_check_branch
        %178 = sbr.rel (%p176) target = $region16
      $region15: #{tpu_custom_call.1} parent=11 // pred_region
        _
      $region16: #{tpu_custom_call.1} parent=11 // pred_fallthru
        _
      // Predicated region
      $region17: #{tpu_custom_call.1} parent=11 // pred_check
        %p179 = pneg %p91
      $region18: #{tpu_custom_call.1} parent=11 // pred_check_branch
        %181 = sbr.rel (%p179) target = $region20
      $region19: #{tpu_custom_call.1} parent=11 // pred_region
        _
      $region20: #{tpu_custom_call.1} parent=11 // pred_fallthru
        _
      // Predicated region
      $region21: #{tpu_custom_call.1} parent=11 // pred_check
        %p182 = pneg %p112
      $region22: #{tpu_custom_call.1} parent=11 // pred_check_branch
        %184 = sbr.rel (%p182) target = $region24
      $region23: #{tpu_custom_call.1} parent=11 // pred_region
        _
      $region24: #{tpu_custom_call.1} parent=11 // pred_fallthru
        _
      // Predicated region
      $region25: #{tpu_custom_call.1} parent=11 // pred_check
        %p185 = pneg %p133
      $region26: #{tpu_custom_call.1} parent=11 // pred_check_branch
        %187 = sbr.rel (%p185) target = $region28
      $region27: #{tpu_custom_call.1} parent=11 // pred_region
        _
      $region28: #{tpu_custom_call.1} parent=11 // pred_fallthru
        _
    $region12: #{tpu_custom_call.1} parent=5 // pred_fallthru
      _
    %p188 = scmp.lt.s32.totalorder %s11, 4
    // Predicated region
    $region29: #{tpu_custom_call.1} parent=5 // pred_check
      %p189 = pneg %p188
    $region30: #{tpu_custom_call.1} parent=5 // pred_check_branch
      %191 = sbr.rel (%p189) target = $region32
    $region31: #{tpu_custom_call.1} parent=5 // pred_region
      // Predicated region
      $region33: #{tpu_custom_call.1} parent=31 // pred_check
        %p192 = pneg %p43
      $region34: #{tpu_custom_call.1} parent=31 // pred_check_branch
        %194 = sbr.rel (%p192) target = $region36
      $region35: #{tpu_custom_call.1} parent=31 // pred_region
        %p195 = scmp.lt.s32.totalorder %s18, 1
        %s196 = scalar_select %p195, %s18, 1
        %s197 = smul.addr %s196, 32
        %s198 = smul.addr %s197, 8
        %s199 = scalar_lea.vmem %s0, %s198
      $region36: #{tpu_custom_call.1} parent=31 // pred_fallthru
        _
    $region32: #{tpu_custom_call.1} parent=5 // pred_fallthru
      _
    %p200 = scmp.le.s32.totalorder 1, %s11
    %p201 = scmp.lt.s32.totalorder %s11, 5
    %p202 = pnand %p200, %p201
    %p203 = pneg %p202
    // Predicated region
    $region37: #{tpu_custom_call.1} parent=5 // pred_check
      _
    $region38: #{tpu_custom_call.1} parent=5 // pred_check_branch
      %205 = sbr.rel (%p202) target = $region40
    $region39: #{tpu_custom_call.1} parent=5 // pred_region
      %s206 = ssub.s32 %s11, 1
      %p207 = scmp.lt.s32.totalorder %s20, 1
      %s208 = scalar_select %p207, %s20, 1
      %s209 = smul.addr %s208, 32
      %s210 = smul.addr %s209, 8
      %s211 = scalar_lea.vmem %s0, %s210
      %p212 = pneg %p49
      %p213 = pneg %p46
      %p214 = pneg %p70
      %p215 = pneg %p67
      %p216 = pneg %p91
      %p217 = pneg %p88
      %p218 = pneg %p112
      %p219 = pneg %p109
      %p220 = pneg %p133
      %p221 = pneg %p130
      %p222 = pneg %p161
      %p223 = pneg %p158
      %s224 = smul.u32 16, %s21
      %p225 = scmp.lt.s32.totalorder %s20, 1
      %s226 = scalar_select %p225, %s20, 1
      %p227 = scmp.lt.s32.totalorder %s224, 31
      %s228 = scalar_select %p227, %s224, 31
      %s229 = smul.addr %s226, 32
      %s230 = sadd.s32 %s228, %s229
      %s231 = smul.addr %s230, 8
      %s232 = scalar_lea.vmem %s5, %s231
      %p233 = scmp.lt.s32.totalorder %s20, 1
      %s234 = scalar_select %p233, %s20, 1
      %s235 = smul.addr %s234, 32
      %s236 = smul.addr %s235, 8
      %s237 = scalar_lea.vmem %s0, %s236
      %s238 = smul.u32 16, %s21
      %p239 = scmp.lt.s32.totalorder %s20, 1
      %s240 = scalar_select %p239, %s20, 1
      %p241 = scmp.lt.s32.totalorder %s238, 31
      %s242 = scalar_select %p241, %s238, 31
      %s243 = smul.addr %s240, 32
      %s244 = sadd.s32 %s242, %s243
      %s245 = smul.addr %s244, 8
      %s246 = scalar_lea.vmem %s5, %s245
      %s247 = smul.u32 16, %s21
      %p249 = scmp.eq.s32.totalorder %s21, 0
      // Predicated region
      $region41: #{tpu_custom_call.1} parent=39 // pred_check
        %p250 = pneg %p249
      $region42: #{tpu_custom_call.1} parent=39 // pred_check_branch
        %252 = sbr.rel (%p250) target = $region44
      $region43: #{tpu_custom_call.1} parent=39 // pred_region
        %v253 = vld [vmem:[%s237] sm:$0xff]
        %v254 = vld [vmem:[%s237 + $0x8] sm:$0xff]
        %v255 = vld [vmem:[%s237 + $0x10] sm:$0xff]
        %v256 = vld [vmem:[%s237 + $0x18] sm:$0xff]
        %v257 = vld [vmem:[%s237 + $0x20] sm:$0xff]
        %v258 = vld [vmem:[%s237 + $0x28] sm:$0xff]
        %v259 = vld [vmem:[%s237 + $0x30] sm:$0xff]
        %v260 = vld [vmem:[%s237 + $0x38] sm:$0xff]
        %v261 = vld [vmem:[%s237 + $0x40] sm:$0xff]
        %v262 = vld [vmem:[%s237 + $0x48] sm:$0xff]
        %v263 = vld [vmem:[%s237 + $0x50] sm:$0xff]
        %v264 = vld [vmem:[%s237 + $0x58] sm:$0xff]
        %v265 = vld [vmem:[%s237 + $0x60] sm:$0xff]
        %v266 = vld [vmem:[%s237 + $0x68] sm:$0xff]
        %v267 = vld [vmem:[%s237 + $0x70] sm:$0xff]
        %v268 = vld [vmem:[%s237 + $0x78] sm:$0xff]
        %v269 = vld [vmem:[%s237 + $0x80] sm:$0xff]
        %v270 = vld [vmem:[%s237 + $0x88] sm:$0xff]
        %v271 = vld [vmem:[%s237 + $0x90] sm:$0xff]
        %v272 = vld [vmem:[%s237 + $0x98] sm:$0xff]
        %v273 = vld [vmem:[%s237 + $0xa0] sm:$0xff]
        %v274 = vld [vmem:[%s237 + $0xa8] sm:$0xff]
        %v275 = vld [vmem:[%s237 + $0xb0] sm:$0xff]
        %v276 = vld [vmem:[%s237 + $0xb8] sm:$0xff]
        %v277 = vld [vmem:[%s237 + $0xc0] sm:$0xff]
        %v278 = vld [vmem:[%s237 + $0xc8] sm:$0xff]
        %v279 = vld [vmem:[%s237 + $0xd0] sm:$0xff]
        %v280 = vld [vmem:[%s237 + $0xd8] sm:$0xff]
        %v281 = vld [vmem:[%s237 + $0xe0] sm:$0xff]
        %v282 = vld [vmem:[%s237 + $0xe8] sm:$0xff]
        %v283 = vld [vmem:[%s237 + $0xf0] sm:$0xff]
        %v284 = vld [vmem:[%s237 + $0xf8] sm:$0xff]
        %v285 = vpack.c.bf16 %v254, %v253
        %v286 = vpack.c.bf16 %v256, %v255
        %v287 = vpack.c.bf16 %v258, %v257
        %v288 = vpack.c.bf16 %v260, %v259
        %v289 = vpack.c.bf16 %v262, %v261
        %v290 = vpack.c.bf16 %v264, %v263
        %v291 = vpack.c.bf16 %v266, %v265
        %v292 = vpack.c.bf16 %v268, %v267
        %v293 = vpack.c.bf16 %v270, %v269
        %v294 = vpack.c.bf16 %v272, %v271
        %v295 = vpack.c.bf16 %v274, %v273
        %v296 = vpack.c.bf16 %v276, %v275
        %v297 = vpack.c.bf16 %v278, %v277
        %v298 = vpack.c.bf16 %v280, %v279
        %v299 = vpack.c.bf16 %v282, %v281
        %v300 = vpack.c.bf16 %v284, %v283
        %v301 = vld [vmem:[%s1] sm:$0x3]
        %v302 = vld [vmem:[%s2] sm:$0x1]
        %v304 = vlaneseq
        %v305 = vshrl.u32 %v304, 7
        %v306 = vsub.s32 0, %v305
        %v307 = vrot.slane %v302, %v306
        %vm309 = vcmask 31744
        %v311 = vsel %vm309, %v285, 0
        %v314 = vsel %vm309, %v286, 0
        %v317 = vsel %vm309, %v287, 0
        %v320 = vsel %vm309, %v288, 0
        %v323 = vsel %vm309, %v289, 0
        %v326 = vsel %vm309, %v290, 0
        %v329 = vsel %vm309, %v291, 0
        %v332 = vsel %vm309, %v292, 0
        %v335 = vsel %vm309, %v293, 0
        %v338 = vsel %vm309, %v294, 0
        %v341 = vsel %vm309, %v295, 0
        %v344 = vsel %vm309, %v296, 0
        %v347 = vsel %vm309, %v297, 0
        %v350 = vsel %vm309, %v298, 0
        %v353 = vsel %vm309, %v299, 0
        %v356 = vsel %vm309, %v300, 0
        %vm358 = vcmask 1041408
        %v360 = vsel %vm358, %v301, 0
        %362 = vmatprep.subr.bf16.mxu0 0
        %363 = vmatpush1.bf16.msra.mxu0 %v360
        %364 = vmatprep.subr.bf16.mxu0 0
        %365 = vmatpush1.bf16.msra.mxu0 0
        %366 = vmatprep.subr.bf16.mxu0 0
        %367 = vmatpush1.bf16.msra.mxu0 0
        %368 = vmatprep.subr.bf16.mxu0 0
        %369 = vmatpush1.bf16.msra.mxu0 0
        %370 = vmatprep.subr.bf16.mxu0 0
        %371 = vmatpush1.bf16.msra.mxu0 0
        %372 = vmatprep.subr.bf16.mxu0 0
        %373 = vmatpush1.bf16.msra.mxu0 0
        %374 = vmatprep.subr.bf16.mxu0 0
        %375 = vmatpush1.bf16.msra.mxu0 0
        %376 = vmatprep.subr.bf16.mxu0 0
        %377 = vmatpush1.bf16.msra.mxu0 0
        %378 = vmatprep.subr.bf16.mxu0 0
        %379 = vmatpush1.bf16.msra.mxu0 0
        %380 = vmatprep.subr.bf16.mxu0 0
        %381 = vmatpush1.bf16.msra.mxu0 0
        %382 = vmatprep.subr.bf16.mxu0 0
        %383 = vmatpush1.bf16.msra.mxu0 0
        %384 = vmatprep.subr.bf16.mxu0 0
        %385 = vmatpush1.bf16.msra.mxu0 0
        %386 = vmatprep.subr.bf16.mxu0 0
        %387 = vmatpush1.bf16.msra.mxu0 0
        %388 = vmatprep.subr.bf16.mxu0 0
        %389 = vmatpush1.bf16.msra.mxu0 0
        %390 = vmatprep.subr.bf16.mxu0 0
        %391 = vmatpush1.bf16.msra.mxu0 0
        %392 = vmatprep.subr.bf16.mxu0 0
        %393 = vmatpush1.bf16.msra.mxu0 0
        %394 = vmatprep.mubr.bf16.mxu0 0
        %395 = vmatmul.mubr.bf16.gmra.mrb[0].mxu0 %v311
        %v396 = vpop.f32.mrb[0].mxu0
        %v397 = vadd.f32 %v307, %v396
        %v398 = vpop.f32.mrb[0].mxu0
        %v399 = vpop.f32.mrb[0].mxu0
        %v400 = vadd.f32 %v307, %v399
        %v401 = vpop.f32.mrb[0].mxu0
        %402 = vmatprep.mubr.bf16.mxu0 0
        %403 = vmatmul.mubr.bf16.gmra.mrb[0].mxu0 %v314
        %v404 = vpop.f32.mrb[0].mxu0
        %v405 = vadd.f32 %v307, %v404
        %v406 = vpop.f32.mrb[0].mxu0
        %v407 = vpop.f32.mrb[0].mxu0
        %v408 = vadd.f32 %v307, %v407
        %v409 = vpop.f32.mrb[0].mxu0
        %410 = vmatprep.mubr.bf16.mxu0 0
        %411 = vmatmul.mubr.bf16.gmra.mrb[0].mxu0 %v317
        %v412 = vpop.f32.mrb[0].mxu0
        %v413 = vadd.f32 %v307, %v412
        %v414 = vpop.f32.mrb[0].mxu0
        %v415 = vpop.f32.mrb[0].mxu0
        %v416 = vadd.f32 %v307, %v415
        %v417 = vpop.f32.mrb[0].mxu0
        %418 = vmatprep.mubr.bf16.mxu0 0
        %419 = vmatmul.mubr.bf16.gmra.mrb[0].mxu0 %v320
        %v420 = vpop.f32.mrb[0].mxu0
        %v421 = vadd.f32 %v307, %v420
        %v422 = vpop.f32.mrb[0].mxu0
        %v423 = vpop.f32.mrb[0].mxu0
        %v424 = vadd.f32 %v307, %v423
        %v425 = vpop.f32.mrb[0].mxu0
        %426 = vmatprep.mubr.bf16.mxu0 0
        %427 = vmatmul.mubr.bf16.gmra.mrb[0].mxu0 %v323
        %v428 = vpop.f32.mrb[0].mxu0
        %v429 = vadd.f32 %v307, %v428
        %v430 = vpop.f32.mrb[0].mxu0
        %v431 = vpop.f32.mrb[0].mxu0
        %v432 = vadd.f32 %v307, %v431
        %v433 = vpop.f32.mrb[0].mxu0
        %434 = vmatprep.mubr.bf16.mxu0 0
        %435 = vmatmul.mubr.bf16.gmra.mrb[0].mxu0 %v326
        %v436 = vpop.f32.mrb[0].mxu0
        %v437 = vadd.f32 %v307, %v436
        %v438 = vpop.f32.mrb[0].mxu0
        %v439 = vpop.f32.mrb[0].mxu0
        %v440 = vadd.f32 %v307, %v439
        %v441 = vpop.f32.mrb[0].mxu0
        %442 = vmatprep.mubr.bf16.mxu0 0
        %443 = vmatmul.mubr.bf16.gmra.mrb[0].mxu0 %v329
        %v444 = vpop.f32.mrb[0].mxu0
        %v445 = vadd.f32 %v307, %v444
        %v446 = vpop.f32.mrb[0].mxu0
        %v447 = vpop.f32.mrb[0].mxu0
        %v448 = vadd.f32 %v307, %v447
        %v449 = vpop.f32.mrb[0].mxu0
        %450 = vmatprep.mubr.bf16.mxu0 0
        %451 = vmatmul.mubr.bf16.gmra.mrb[0].mxu0 %v332
        %v452 = vpop.f32.mrb[0].mxu0
        %v453 = vadd.f32 %v307, %v452
        %v454 = vpop.f32.mrb[0].mxu0
        %v455 = vpop.f32.mrb[0].mxu0
        %v456 = vadd.f32 %v307, %v455
        %v457 = vpop.f32.mrb[0].mxu0
        %458 = vmatprep.mubr.bf16.mxu0 0
        %459 = vmatmul.mubr.bf16.gmra.mrb[0].mxu0 %v335
        %v460 = vpop.f32.mrb[0].mxu0
        %v461 = vadd.f32 %v307, %v460
        %v462 = vpop.f32.mrb[0].mxu0
        %v463 = vpop.f32.mrb[0].mxu0
        %v464 = vadd.f32 %v307, %v463
        %v465 = vpop.f32.mrb[0].mxu0
        %466 = vmatprep.mubr.bf16.mxu0 0
        %467 = vmatmul.mubr.bf16.gmra.mrb[0].mxu0 %v338
        %v468 = vpop.f32.mrb[0].mxu0
        %v469 = vadd.f32 %v307, %v468
        %v470 = vpop.f32.mrb[0].mxu0
        %v471 = vpop.f32.mrb[0].mxu0
        %v472 = vadd.f32 %v307, %v471
        %v473 = vpop.f32.mrb[0].mxu0
        %474 = vmatprep.mubr.bf16.mxu0 0
        %475 = vmatmul.mubr.bf16.gmra.mrb[0].mxu0 %v341
        %v476 = vpop.f32.mrb[0].mxu0
        %v477 = vadd.f32 %v307, %v476
        %v478 = vpop.f32.mrb[0].mxu0
        %v479 = vpop.f32.mrb[0].mxu0
        %v480 = vadd.f32 %v307, %v479
        %v481 = vpop.f32.mrb[0].mxu0
        %482 = vmatprep.mubr.bf16.mxu0 0
        %483 = vmatmul.mubr.bf16.gmra.mrb[0].mxu0 %v344
        %v484 = vpop.f32.mrb[0].mxu0
        %v485 = vadd.f32 %v307, %v484
        %v486 = vpop.f32.mrb[0].mxu0
        %v487 = vpop.f32.mrb[0].mxu0
        %v488 = vadd.f32 %v307, %v487
        %v489 = vpop.f32.mrb[0].mxu0
        %490 = vmatprep.mubr.bf16.mxu0 0
        %491 = vmatmul.mubr.bf16.gmra.mrb[0].mxu0 %v347
        %v492 = vpop.f32.mrb[0].mxu0
        %v493 = vadd.f32 %v307, %v492
        %v494 = vpop.f32.mrb[0].mxu0
        %v495 = vpop.f32.mrb[0].mxu0
        %v496 = vadd.f32 %v307, %v495
        %v497 = vpop.f32.mrb[0].mxu0
        %498 = vmatprep.mubr.bf16.mxu0 0
        %499 = vmatmul.mubr.bf16.gmra.mrb[0].mxu0 %v350
        %v500 = vpop.f32.mrb[0].mxu0
        %v501 = vadd.f32 %v307, %v500
        %v502 = vpop.f32.mrb[0].mxu0
        %v503 = vpop.f32.mrb[0].mxu0
        %v504 = vadd.f32 %v307, %v503
        %v505 = vpop.f32.mrb[0].mxu0
        %506 = vmatprep.mubr.bf16.mxu0 0
        %507 = vmatmul.mubr.bf16.gmra.mrb[0].mxu0 %v353
        %v508 = vpop.f32.mrb[0].mxu0
        %v509 = vadd.f32 %v307, %v508
        %v510 = vpop.f32.mrb[0].mxu0
        %v511 = vpop.f32.mrb[0].mxu0
        %v512 = vadd.f32 %v307, %v511
        %v513 = vpop.f32.mrb[0].mxu0
        %514 = vmatprep.mubr.bf16.mxu0 0
        %515 = vmatmul.mubr.bf16.gmra.mrb[0].mxu0 %v356
        %v516 = vpop.f32.mrb[0].mxu0
        %v517 = vadd.f32 %v307, %v516
        %v518 = vpop.f32.mrb[0].mxu0
        %v519 = vpop.f32.mrb[0].mxu0
        %v520 = vadd.f32 %v307, %v519
        %v521 = vpop.f32.mrb[0].mxu0
        %522 = vdwg.mxu0
        %v523 = vpack.c.bf16 %v400, %v397
        %v524 = vpack.c.bf16 %v408, %v405
        %v525 = vpack.c.bf16 %v416, %v413
        %v526 = vpack.c.bf16 %v424, %v421
        %v527 = vpack.c.bf16 %v432, %v429
        %v528 = vpack.c.bf16 %v440, %v437
        %v529 = vpack.c.bf16 %v448, %v445
        %v530 = vpack.c.bf16 %v456, %v453
        %v531 = vpack.c.bf16 %v464, %v461
        %v532 = vpack.c.bf16 %v472, %v469
        %v533 = vpack.c.bf16 %v480, %v477
        %v534 = vpack.c.bf16 %v488, %v485
        %v535 = vpack.c.bf16 %v496, %v493
        %v536 = vpack.c.bf16 %v504, %v501
        %v537 = vpack.c.bf16 %v512, %v509
        %v538 = vpack.c.bf16 %v520, %v517
        %vm539 = vcmask 15360
        %540 = vst.msk [vmem:[#allocation2] sm:$0xff] %vm539, %v523
        %541 = vst.msk [vmem:[#allocation2 + $0x8] sm:$0xff] %vm539, %v524
        %542 = vst.msk [vmem:[#allocation2 + $0x10] sm:$0xff] %vm539, %v525
        %543 = vst.msk [vmem:[#allocation2 + $0x18] sm:$0xff] %vm539, %v526
        %544 = vst.msk [vmem:[#allocation2 + $0x20] sm:$0xff] %vm539, %v527
        %545 = vst.msk [vmem:[#allocation2 + $0x28] sm:$0xff] %vm539, %v528
        %546 = vst.msk [vmem:[#allocation2 + $0x30] sm:$0xff] %vm539, %v529
        %547 = vst.msk [vmem:[#allocation2 + $0x38] sm:$0xff] %vm539, %v530
        %548 = vst.msk [vmem:[#allocation2 + $0x40] sm:$0xff] %vm539, %v531
        %549 = vst.msk [vmem:[#allocation2 + $0x48] sm:$0xff] %vm539, %v532
        %550 = vst.msk [vmem:[#allocation2 + $0x50] sm:$0xff] %vm539, %v533
        %551 = vst.msk [vmem:[#allocation2 + $0x58] sm:$0xff] %vm539, %v534
        %552 = vst.msk [vmem:[#allocation2 + $0x60] sm:$0xff] %vm539, %v535
        %553 = vst.msk [vmem:[#allocation2 + $0x68] sm:$0xff] %vm539, %v536
        %554 = vst.msk [vmem:[#allocation2 + $0x70] sm:$0xff] %vm539, %v537
        %555 = vst.msk [vmem:[#allocation2 + $0x78] sm:$0xff] %vm539, %v538
        %v556 = vmax.f32 %v397, %v429
        %v557 = vmax.f32 %v400, %v432
        %v558 = vmax.f32 %v405, %v437
        %v559 = vmax.f32 %v408, %v440
        %v560 = vmax.f32 %v413, %v445
        %v561 = vmax.f32 %v416, %v448
        %v562 = vmax.f32 %v421, %v453
        %v563 = vmax.f32 %v424, %v456
        %v564 = vmax.f32 %v556, %v461
        %v565 = vmax.f32 %v557, %v464
        %v566 = vmax.f32 %v558, %v469
        %v567 = vmax.f32 %v559, %v472
        %v568 = vmax.f32 %v560, %v477
        %v569 = vmax.f32 %v561, %v480
        %v570 = vmax.f32 %v562, %v485
        %v571 = vmax.f32 %v563, %v488
        %v572 = vmax.f32 %v564, %v493
        %v573 = vmax.f32 %v565, %v496
        %v574 = vmax.f32 %v566, %v501
        %v575 = vmax.f32 %v567, %v504
        %v576 = vmax.f32 %v568, %v509
        %v577 = vmax.f32 %v569, %v512
        %v578 = vmax.f32 %v570, %v517
        %v579 = vmax.f32 %v571, %v520
        %v580 = vpack.c.bf16 %v573, %v572
        %v581 = vpack.c.bf16 %v575, %v574
        %v582 = vpack.c.bf16 %v577, %v576
        %v583 = vpack.c.bf16 %v579, %v578
        %588 = vrot.lane.b32.xlu0 %v580, 126
        %v589 = vpop.permute.xlu0 %588
        %590 = vrot.lane.b32.xlu0 %v581, 126
        %v591 = vpop.permute.xlu0 %590
        %592 = vrot.lane.b32.xlu0 %v582, 126
        %v593 = vpop.permute.xlu0 %592
        %594 = vrot.lane.b32.xlu0 %v583, 126
        %v595 = vpop.permute.xlu0 %594
        %600 = vst.msk [vmem:[#allocation3] sm:$0xff] %vm539, %v589
        %601 = vst.msk [vmem:[#allocation3 + $0x8] sm:$0xff] %vm539, %v591
        %602 = vst.msk [vmem:[#allocation3 + $0x10] sm:$0xff] %vm539, %v593
        %603 = vst.msk [vmem:[#allocation3 + $0x18] sm:$0xff] %vm539, %v595
        %604 = vrot.lane.b32.xlu0 %v580, 124
        %v605 = vpop.permute.xlu0 %604
        %606 = vrot.lane.b32.xlu0 %v581, 124
        %v607 = vpop.permute.xlu0 %606
        %608 = vrot.lane.b32.xlu0 %v582, 124
        %v609 = vpop.permute.xlu0 %608
        %610 = vrot.lane.b32.xlu0 %v583, 124
        %v611 = vpop.permute.xlu0 %610
        %616 = vst.msk [vmem:[#allocation4] sm:$0xff] %vm539, %v605
        %617 = vst.msk [vmem:[#allocation4 + $0x8] sm:$0xff] %vm539, %v607
        %618 = vst.msk [vmem:[#allocation4 + $0x10] sm:$0xff] %vm539, %v609
        %619 = vst.msk [vmem:[#allocation4 + $0x18] sm:$0xff] %vm539, %v611
      $region44: #{tpu_custom_call.1} parent=39 // pred_fallthru
        _
      %s620 = smul.u32 %s21, 128
      %s621 = sshra.s32 %s620, 4
      %s622 = sand.u32 %s620, 15
      %s623 = smul.addr %s621, 8
      %s624 = scalar_lea.vmem [#allocation2], %s623
      %v625 = vld [vmem:[%s624] sm:$0xff]
      %v626 = vld [vmem:[%s624 + $0x8] sm:$0xff]
      %v627 = vld [vmem:[%s624 + $0x10] sm:$0xff]
      %v628 = vld [vmem:[%s624 + $0x18] sm:$0xff]
      %v629 = vld [vmem:[%s624 + $0x20] sm:$0xff]
      %v630 = vld [vmem:[%s624 + $0x28] sm:$0xff]
      %v631 = vld [vmem:[%s624 + $0x30] sm:$0xff]
      %v632 = vld [vmem:[%s624 + $0x38] sm:$0xff]
      %v633 = vld [vmem:[#allocation3] sm:$0xff]
      %v634 = vld [vmem:[#allocation3 + $0x8] sm:$0xff]
      %v635 = vld [vmem:[#allocation3 + $0x10] sm:$0xff]
      %v636 = vld [vmem:[#allocation3 + $0x18] sm:$0xff]
      %vm637 = vcmask 15360
      %v639 = vsel %vm637, %v625, 0
      %v642 = vsel %vm637, %v626, 0
      %v645 = vsel %vm637, %v627, 0
      %v648 = vsel %vm637, %v628, 0
      %v651 = vsel %vm637, %v629, 0
      %v654 = vsel %vm637, %v630, 0
      %v657 = vsel %vm637, %v631, 0
      %v660 = vsel %vm637, %v632, 0
      %v663 = vsel %vm637, %v633, 0
      %v666 = vsel %vm637, %v634, 0
      %v669 = vsel %vm637, %v635, 0
      %v672 = vsel %vm637, %v636, 0
      %674 = vmatprep.subr.bf16.mxu0 0
      %675 = vmatpush1.bf16.xpose.msra.mxu0 %v663
      %676 = vmatprep.subr.bf16.mxu0 0
      %677 = vmatpush1.bf16.xpose.msra.mxu0 %v666
      %678 = vmatprep.subr.bf16.mxu0 0
      %679 = vmatpush1.bf16.xpose.msra.mxu0 %v669
      %680 = vmatprep.subr.bf16.mxu0 0
      %681 = vmatpush1.bf16.xpose.msra.mxu0 %v672
      %682 = vmatprep.subr.bf16.mxu0 0
      %683 = vmatpush1.bf16.xpose.msra.mxu0 0
      %684 = vmatprep.subr.bf16.mxu0 0
      %685 = vmatpush1.bf16.xpose.msra.mxu0 0
      %686 = vmatprep.subr.bf16.mxu0 0
      %687 = vmatpush1.bf16.xpose.msra.mxu0 0
      %688 = vmatprep.subr.bf16.mxu0 0
      %689 = vmatpush1.bf16.xpose.msra.mxu0 0
      %690 = vmatprep.subr.bf16.mxu0 0
      %691 = vmatpush1.bf16.xpose.msra.mxu0 0
      %692 = vmatprep.subr.bf16.mxu0 0
      %693 = vmatpush1.bf16.xpose.msra.mxu0 0
      %694 = vmatprep.subr.bf16.mxu0 0
      %695 = vmatpush1.bf16.xpose.msra.mxu0 0
      %696 = vmatprep.subr.bf16.mxu0 0
      %697 = vmatpush1.bf16.xpose.msra.mxu0 0
      %698 = vmatprep.subr.bf16.mxu0 0
      %699 = vmatpush1.bf16.xpose.msra.mxu0 0
      %700 = vmatprep.subr.bf16.mxu0 0
      %701 = vmatpush1.bf16.xpose.msra.mxu0 0
      %702 = vmatprep.subr.bf16.mxu0 0
      %703 = vmatpush1.bf16.xpose.msra.mxu0 0
      %704 = vmatprep.subr.bf16.mxu0 0
      %705 = vmatpush1.bf16.xpose.msra.mxu0 0
      %706 = vmatprep.mubr.bf16.mxu0 0
      %707 = vmatmul.mubr.bf16.gmra.mrb[0].mxu0 %v639
      %v708 = vpop.f32.mrb[0].mxu0
      %v709 = vadd.f32 0.0, %v708
      %v710 = vpop.f32.mrb[0].mxu0
      %v711 = vpop.f32.mrb[0].mxu0
      %v712 = vadd.f32 0.0, %v711
      %v713 = vpop.f32.mrb[0].mxu0
      %714 = vmatprep.mubr.bf16.mxu0 0
      %715 = vmatmul.mubr.bf16.gmra.mrb[0].mxu0 %v642
      %v716 = vpop.f32.mrb[0].mxu0
      %v717 = vadd.f32 0.0, %v716
      %v718 = vpop.f32.mrb[0].mxu0
      %v719 = vpop.f32.mrb[0].mxu0
      %v720 = vadd.f32 0.0, %v719
      %v721 = vpop.f32.mrb[0].mxu0
      %722 = vmatprep.mubr.bf16.mxu0 0
      %723 = vmatmul.mubr.bf16.gmra.mrb[0].mxu0 %v645
      %v724 = vpop.f32.mrb[0].mxu0
      %v725 = vadd.f32 0.0, %v724
      %v726 = vpop.f32.mrb[0].mxu0
      %v727 = vpop.f32.mrb[0].mxu0
      %v728 = vadd.f32 0.0, %v727
      %v729 = vpop.f32.mrb[0].mxu0
      %730 = vmatprep.mubr.bf16.mxu0 0
      %731 = vmatmul.mubr.bf16.gmra.mrb[0].mxu0 %v648
      %v732 = vpop.f32.mrb[0].mxu0
      %v733 = vadd.f32 0.0, %v732
      %v734 = vpop.f32.mrb[0].mxu0
      %v735 = vpop.f32.mrb[0].mxu0
      %v736 = vadd.f32 0.0, %v735
      %v737 = vpop.f32.mrb[0].mxu0
      %738 = vmatprep.mubr.bf16.mxu0 0
      %739 = vmatmul.mubr.bf16.gmra.mrb[0].mxu0 %v651
      %v740 = vpop.f32.mrb[0].mxu0
      %v741 = vadd.f32 0.0, %v740
      %v742 = vpop.f32.mrb[0].mxu0
      %v743 = vpop.f32.mrb[0].mxu0
      %v744 = vadd.f32 0.0, %v743
      %v745 = vpop.f32.mrb[0].mxu0
      %746 = vmatprep.mubr.bf16.mxu0 0
      %747 = vmatmul.mubr.bf16.gmra.mrb[0].mxu0 %v654
      %v748 = vpop.f32.mrb[0].mxu0
      %v749 = vadd.f32 0.0, %v748
      %v750 = vpop.f32.mrb[0].mxu0
      %v751 = vpop.f32.mrb[0].mxu0
      %v752 = vadd.f32 0.0, %v751
      %v753 = vpop.f32.mrb[0].mxu0
      %754 = vmatprep.mubr.bf16.mxu0 0
      %755 = vmatmul.mubr.bf16.gmra.mrb[0].mxu0 %v657
      %v756 = vpop.f32.mrb[0].mxu0
      %v757 = vadd.f32 0.0, %v756
      %v758 = vpop.f32.mrb[0].mxu0
      %v759 = vpop.f32.mrb[0].mxu0
      %v760 = vadd.f32 0.0, %v759
      %v761 = vpop.f32.mrb[0].mxu0
      %762 = vmatprep.mubr.bf16.mxu0 0
      %763 = vmatmul.mubr.bf16.gmra.mrb[0].mxu0 %v660
      %v764 = vpop.f32.mrb[0].mxu0
      %v765 = vadd.f32 0.0, %v764
      %v766 = vpop.f32.mrb[0].mxu0
      %v767 = vpop.f32.mrb[0].mxu0
      %v768 = vadd.f32 0.0, %v767
      %v769 = vpop.f32.mrb[0].mxu0
      %770 = vdwg.mxu0
      %vm771 = vcmask 523264
      %v772 = vsel %vm771, %v709, -inf
      %773 = vmax.xlane.f32.xlu0 %v772
      %v774 = vpop.xlane.xlu0 %773
      %v775 = vsel %vm771, %v712, -inf
      %776 = vmax.xlane.f32.xlu0 %v775
      %v777 = vpop.xlane.xlu0 %776
      %v778 = vsel %vm771, %v717, -inf
      %779 = vmax.xlane.f32.xlu0 %v778
      %v780 = vpop.xlane.xlu0 %779
      %v781 = vsel %vm771, %v720, -inf
      %782 = vmax.xlane.f32.xlu0 %v781
      %v783 = vpop.xlane.xlu0 %782
      %v784 = vsel %vm771, %v725, -inf
      %785 = vmax.xlane.f32.xlu0 %v784
      %v786 = vpop.xlane.xlu0 %785
      %v787 = vsel %vm771, %v728, -inf
      %788 = vmax.xlane.f32.xlu0 %v787
      %v789 = vpop.xlane.xlu0 %788
      %v790 = vsel %vm771, %v733, -inf
      %791 = vmax.xlane.f32.xlu0 %v790
      %v792 = vpop.xlane.xlu0 %791
      %v793 = vsel %vm771, %v736, -inf
      %794 = vmax.xlane.f32.xlu0 %v793
      %v795 = vpop.xlane.xlu0 %794
      %v796 = vsel %vm771, %v741, -inf
      %797 = vmax.xlane.f32.xlu0 %v796
      %v798 = vpop.xlane.xlu0 %797
      %v799 = vsel %vm771, %v744, -inf
      %800 = vmax.xlane.f32.xlu0 %v799
      %v801 = vpop.xlane.xlu0 %800
      %v802 = vsel %vm771, %v749, -inf
      %803 = vmax.xlane.f32.xlu0 %v802
      %v804 = vpop.xlane.xlu0 %803
      %v805 = vsel %vm771, %v752, -inf
      %806 = vmax.xlane.f32.xlu0 %v805
      %v807 = vpop.xlane.xlu0 %806
      %v808 = vsel %vm771, %v757, -inf
      %809 = vmax.xlane.f32.xlu0 %v808
      %v810 = vpop.xlane.xlu0 %809
      %v811 = vsel %vm771, %v760, -inf
      %812 = vmax.xlane.f32.xlu0 %v811
      %v813 = vpop.xlane.xlu0 %812
      %v814 = vsel %vm771, %v765, -inf
      %815 = vmax.xlane.f32.xlu0 %v814
      %v816 = vpop.xlane.xlu0 %815
      %v817 = vsel %vm771, %v768, -inf
      %818 = vmax.xlane.f32.xlu0 %v817
      %v819 = vpop.xlane.xlu0 %818
      %v820 = vsub.f32 %v709, %v774
      %v821 = vsub.f32 %v712, %v777
      %v822 = vsub.f32 %v717, %v780
      %v823 = vsub.f32 %v720, %v783
      %v824 = vsub.f32 %v725, %v786
      %v825 = vsub.f32 %v728, %v789
      %v826 = vsub.f32 %v733, %v792
      %v827 = vsub.f32 %v736, %v795
      %v828 = vsub.f32 %v741, %v798
      %v829 = vsub.f32 %v744, %v801
      %v830 = vsub.f32 %v749, %v804
      %v831 = vsub.f32 %v752, %v807
      %v832 = vsub.f32 %v757, %v810
      %v833 = vsub.f32 %v760, %v813
      %v834 = vsub.f32 %v765, %v816
      %v835 = vsub.f32 %v768, %v819
      %v836 = vmul.f32 %v820, 1.442695
      %v837 = vpow.pop %v836
      %v838 = vmul.f32 %v821, 1.442695
      %v839 = vpow.pop %v838
      %v840 = vmul.f32 %v822, 1.442695
      %v841 = vpow.pop %v840
      %v842 = vmul.f32 %v823, 1.442695
      %v843 = vpow.pop %v842
      %v844 = vmul.f32 %v824, 1.442695
      %v845 = vpow.pop %v844
      %v846 = vmul.f32 %v825, 1.442695
      %v847 = vpow.pop %v846
      %v848 = vmul.f32 %v826, 1.442695
      %v849 = vpow.pop %v848
      %v850 = vmul.f32 %v827, 1.442695
      %v851 = vpow.pop %v850
      %v852 = vmul.f32 %v828, 1.442695
      %v853 = vpow.pop %v852
      %v854 = vmul.f32 %v829, 1.442695
      %v855 = vpow.pop %v854
      %v856 = vmul.f32 %v830, 1.442695
      %v857 = vpow.pop %v856
      %v858 = vmul.f32 %v831, 1.442695
      %v859 = vpow.pop %v858
      %v860 = vmul.f32 %v832, 1.442695
      %v861 = vpow.pop %v860
      %v862 = vmul.f32 %v833, 1.442695
      %v863 = vpow.pop %v862
      %v864 = vmul.f32 %v834, 1.442695
      %v865 = vpow.pop %v864
      %v866 = vmul.f32 %v835, 1.442695
      %v867 = vpow.pop %v866
      %v868 = vsel %vm771, %v837, 0.0
      %869 = vadd.xlane.f32.xlu0 %v868
      %v870 = vpop.xlane.xlu0 %869
      %v871 = vsel %vm771, %v839, 0.0
      %872 = vadd.xlane.f32.xlu0 %v871
      %v873 = vpop.xlane.xlu0 %872
      %v874 = vsel %vm771, %v841, 0.0
      %875 = vadd.xlane.f32.xlu0 %v874
      %v876 = vpop.xlane.xlu0 %875
      %v877 = vsel %vm771, %v843, 0.0
      %878 = vadd.xlane.f32.xlu0 %v877
      %v879 = vpop.xlane.xlu0 %878
      %v880 = vsel %vm771, %v845, 0.0
      %881 = vadd.xlane.f32.xlu0 %v880
      %v882 = vpop.xlane.xlu0 %881
      %v883 = vsel %vm771, %v847, 0.0
      %884 = vadd.xlane.f32.xlu0 %v883
      %v885 = vpop.xlane.xlu0 %884
      %v886 = vsel %vm771, %v849, 0.0
      %887 = vadd.xlane.f32.xlu0 %v886
      %v888 = vpop.xlane.xlu0 %887
      %v889 = vsel %vm771, %v851, 0.0
      %890 = vadd.xlane.f32.xlu0 %v889
      %v891 = vpop.xlane.xlu0 %890
      %v892 = vsel %vm771, %v853, 0.0
      %893 = vadd.xlane.f32.xlu0 %v892
      %v894 = vpop.xlane.xlu0 %893
      %v895 = vsel %vm771, %v855, 0.0
      %896 = vadd.xlane.f32.xlu0 %v895
      %v897 = vpop.xlane.xlu0 %896
      %v898 = vsel %vm771, %v857, 0.0
      %899 = vadd.xlane.f32.xlu0 %v898
      %v900 = vpop.xlane.xlu0 %899
      %v901 = vsel %vm771, %v859, 0.0
      %902 = vadd.xlane.f32.xlu0 %v901
      %v903 = vpop.xlane.xlu0 %902
      %v904 = vsel %vm771, %v861, 0.0
      %905 = vadd.xlane.f32.xlu0 %v904
      %v906 = vpop.xlane.xlu0 %905
      %v907 = vsel %vm771, %v863, 0.0
      %908 = vadd.xlane.f32.xlu0 %v907
      %v909 = vpop.xlane.xlu0 %908
      %v910 = vsel %vm771, %v865, 0.0
      %911 = vadd.xlane.f32.xlu0 %v910
      %v912 = vpop.xlane.xlu0 %911
      %v913 = vsel %vm771, %v867, 0.0
      %914 = vadd.xlane.f32.xlu0 %v913
      %v915 = vpop.xlane.xlu0 %914
      %v916 = vrcp.pop %v870
      %v917 = vrcp.pop %v873
      %v918 = vrcp.pop %v876
      %v919 = vrcp.pop %v879
      %v920 = vrcp.pop %v882
      %v921 = vrcp.pop %v885
      %v922 = vrcp.pop %v888
      %v923 = vrcp.pop %v891
      %v924 = vrcp.pop %v894
      %v925 = vrcp.pop %v897
      %v926 = vrcp.pop %v900
      %v927 = vrcp.pop %v903
      %v928 = vrcp.pop %v906
      %v929 = vrcp.pop %v909
      %v930 = vrcp.pop %v912
      %v931 = vrcp.pop %v915
      %v932 = vmul.f32 %v837, %v916
      %v933 = vmul.f32 %v839, %v917
      %v934 = vmul.f32 %v841, %v918
      %v935 = vmul.f32 %v843, %v919
      %v936 = vmul.f32 %v845, %v920
      %v937 = vmul.f32 %v847, %v921
      %v938 = vmul.f32 %v849, %v922
      %v939 = vmul.f32 %v851, %v923
      %v940 = vmul.f32 %v853, %v924
      %v941 = vmul.f32 %v855, %v925
      %v942 = vmul.f32 %v857, %v926
      %v943 = vmul.f32 %v859, %v927
      %v944 = vmul.f32 %v861, %v928
      %v945 = vmul.f32 %v863, %v929
      %v946 = vmul.f32 %v865, %v930
      %v947 = vmul.f32 %v867, %v931
      %v948 = vpack.c.bf16 %v933, %v932
      %v949 = vpack.c.bf16 %v935, %v934
      %v950 = vpack.c.bf16 %v937, %v936
      %v951 = vpack.c.bf16 %v939, %v938
      %v952 = vpack.c.bf16 %v941, %v940
      %v953 = vpack.c.bf16 %v943, %v942
      %v954 = vpack.c.bf16 %v945, %v944
      %v955 = vpack.c.bf16 %v947, %v946
      %v956 = vld [vmem:[#allocation4] sm:$0xff]
      %v957 = vld [vmem:[#allocation4 + $0x8] sm:$0xff]
      %v958 = vld [vmem:[#allocation4 + $0x10] sm:$0xff]
      %v959 = vld [vmem:[#allocation4 + $0x18] sm:$0xff]
      %v961 = vsel %vm771, %v948, 0
      %v964 = vsel %vm771, %v949, 0
      %v967 = vsel %vm771, %v950, 0
      %v970 = vsel %vm771, %v951, 0
      %v973 = vsel %vm771, %v952, 0
      %v976 = vsel %vm771, %v953, 0
      %v979 = vsel %vm771, %v954, 0
      %v982 = vsel %vm771, %v955, 0
      %984 = vmatprep.subr.bf16.mxu0 0
      %985 = vmatpush1.bf16.msra.mxu0 %v956
      %986 = vmatprep.subr.bf16.mxu0 0
      %987 = vmatpush1.bf16.msra.mxu0 %v957
      %988 = vmatprep.subr.bf16.mxu0 0
      %989 = vmatpush1.bf16.msra.mxu0 %v958
      %990 = vmatprep.subr.bf16.mxu0 0
      %991 = vmatpush1.bf16.msra.mxu0 %v959
      %992 = vmatprep.subr.bf16.mxu0 0
      %993 = vmatpush1.bf16.msra.mxu0 0
      %994 = vmatprep.subr.bf16.mxu0 0
      %995 = vmatpush1.bf16.msra.mxu0 0
      %996 = vmatprep.subr.bf16.mxu0 0
      %997 = vmatpush1.bf16.msra.mxu0 0
      %998 = vmatprep.subr.bf16.mxu0 0
      %999 = vmatpush1.bf16.msra.mxu0 0
      %1000 = vmatprep.subr.bf16.mxu0 0
      %1001 = vmatpush1.bf16.msra.mxu0 0
      %1002 = vmatprep.subr.bf16.mxu0 0
      %1003 = vmatpush1.bf16.msra.mxu0 0
      %1004 = vmatprep.subr.bf16.mxu0 0
      %1005 = vmatpush1.bf16.msra.mxu0 0
      %1006 = vmatprep.subr.bf16.mxu0 0
      %1007 = vmatpush1.bf16.msra.mxu0 0
      %1008 = vmatprep.subr.bf16.mxu0 0
      %1009 = vmatpush1.bf16.msra.mxu0 0
      %1010 = vmatprep.subr.bf16.mxu0 0
      %1011 = vmatpush1.bf16.msra.mxu0 0
      %1012 = vmatprep.subr.bf16.mxu0 0
      %1013 = vmatpush1.bf16.msra.mxu0 0
      %1014 = vmatprep.subr.bf16.mxu0 0
      %1015 = vmatpush1.bf16.msra.mxu0 0
      %1016 = vmatprep.mubr.bf16.mxu0 0
      %1017 = vmatmul.mubr.bf16.gmra.mrb[0].mxu0 %v961
      %v1018 = vpop.f32.mrb[0].mxu0
      %v1019 = vadd.f32 0.0, %v1018
      %v1020 = vpop.f32.mrb[0].mxu0
      %v1021 = vpop.f32.mrb[0].mxu0
      %v1022 = vadd.f32 0.0, %v1021
      %v1023 = vpop.f32.mrb[0].mxu0
      %1024 = vmatprep.mubr.bf16.mxu0 0
      %1025 = vmatmul.mubr.bf16.gmra.mrb[0].mxu0 %v964
      %v1026 = vpop.f32.mrb[0].mxu0
      %v1027 = vadd.f32 0.0, %v1026
      %v1028 = vpop.f32.mrb[0].mxu0
      %v1029 = vpop.f32.mrb[0].mxu0
      %v1030 = vadd.f32 0.0, %v1029
      %v1031 = vpop.f32.mrb[0].mxu0
      %1032 = vmatprep.mubr.bf16.mxu0 0
      %1033 = vmatmul.mubr.bf16.gmra.mrb[0].mxu0 %v967
      %v1034 = vpop.f32.mrb[0].mxu0
      %v1035 = vadd.f32 0.0, %v1034
      %v1036 = vpop.f32.mrb[0].mxu0
      %v1037 = vpop.f32.mrb[0].mxu0
      %v1038 = vadd.f32 0.0, %v1037
      %v1039 = vpop.f32.mrb[0].mxu0
      %1040 = vmatprep.mubr.bf16.mxu0 0
      %1041 = vmatmul.mubr.bf16.gmra.mrb[0].mxu0 %v970
      %v1042 = vpop.f32.mrb[0].mxu0
      %v1043 = vadd.f32 0.0, %v1042
      %v1044 = vpop.f32.mrb[0].mxu0
      %v1045 = vpop.f32.mrb[0].mxu0
      %v1046 = vadd.f32 0.0, %v1045
      %v1047 = vpop.f32.mrb[0].mxu0
      %1048 = vmatprep.mubr.bf16.mxu0 0
      %1049 = vmatmul.mubr.bf16.gmra.mrb[0].mxu0 %v973
      %v1050 = vpop.f32.mrb[0].mxu0
      %v1051 = vadd.f32 0.0, %v1050
      %v1052 = vpop.f32.mrb[0].mxu0
      %v1053 = vpop.f32.mrb[0].mxu0
      %v1054 = vadd.f32 0.0, %v1053
      %v1055 = vpop.f32.mrb[0].mxu0
      %1056 = vmatprep.mubr.bf16.mxu0 0
      %1057 = vmatmul.mubr.bf16.gmra.mrb[0].mxu0 %v976
      %v1058 = vpop.f32.mrb[0].mxu0
      %v1059 = vadd.f32 0.0, %v1058
      %v1060 = vpop.f32.mrb[0].mxu0
      %v1061 = vpop.f32.mrb[0].mxu0
      %v1062 = vadd.f32 0.0, %v1061
      %v1063 = vpop.f32.mrb[0].mxu0
      %1064 = vmatprep.mubr.bf16.mxu0 0
      %1065 = vmatmul.mubr.bf16.gmra.mrb[0].mxu0 %v979
      %v1066 = vpop.f32.mrb[0].mxu0
      %v1067 = vadd.f32 0.0, %v1066
      %v1068 = vpop.f32.mrb[0].mxu0
      %v1069 = vpop.f32.mrb[0].mxu0
      %v1070 = vadd.f32 0.0, %v1069
      %v1071 = vpop.f32.mrb[0].mxu0
      %1072 = vmatprep.mubr.bf16.mxu0 0
      %1073 = vmatmul.mubr.bf16.gmra.mrb[0].mxu0 %v982
      %v1074 = vpop.f32.mrb[0].mxu0
      %v1075 = vadd.f32 0.0, %v1074
      %v1076 = vpop.f32.mrb[0].mxu0
      %v1077 = vpop.f32.mrb[0].mxu0
      %v1078 = vadd.f32 0.0, %v1077
      %v1079 = vpop.f32.mrb[0].mxu0
      %1080 = vdwg.mxu0
      %v1081 = vpack.c.bf16 %v1022, %v1019
      %v1082 = vpack.c.bf16 %v1030, %v1027
      %v1083 = vpack.c.bf16 %v1038, %v1035
      %v1084 = vpack.c.bf16 %v1046, %v1043
      %v1085 = vpack.c.bf16 %v1054, %v1051
      %v1086 = vpack.c.bf16 %v1062, %v1059
      %v1087 = vpack.c.bf16 %v1070, %v1067
      %v1088 = vpack.c.bf16 %v1078, %v1075
      %v1089 = vld [vmem:[%s3] sm:$0x1]
      %v1090 = vld [vmem:[%s4] sm:$0x1]
      %v1092 = vlaneseq
      %v1093 = vshrl.u32 %v1092, 7
      %v1094 = vsub.s32 0, %v1093
      %v1095 = vrot.slane %v1090, %v1094
      %v1098 = vsel %vm637, %v1081, 0
      %v1101 = vsel %vm637, %v1082, 0
      %v1104 = vsel %vm637, %v1083, 0
      %v1107 = vsel %vm637, %v1084, 0
      %v1110 = vsel %vm637, %v1085, 0
      %v1113 = vsel %vm637, %v1086, 0
      %v1116 = vsel %vm637, %v1087, 0
      %v1119 = vsel %vm637, %v1088, 0
      %vm1121 = vcmask 1040384
      %v1123 = vsel %vm1121, %v1089, 0
      %1125 = vmatprep.subr.bf16.mxu0 0
      %1126 = vmatpush1.bf16.msra.mxu0 %v1123
      %1127 = vmatprep.subr.bf16.mxu0 0
      %1128 = vmatpush1.bf16.msra.mxu0 0
      %1129 = vmatprep.subr.bf16.mxu0 0
      %1130 = vmatpush1.bf16.msra.mxu0 0
      %1131 = vmatprep.subr.bf16.mxu0 0
      %1132 = vmatpush1.bf16.msra.mxu0 0
      %1133 = vmatprep.subr.bf16.mxu0 0
      %1134 = vmatpush1.bf16.msra.mxu0 0
      %1135 = vmatprep.subr.bf16.mxu0 0
      %1136 = vmatpush1.bf16.msra.mxu0 0
      %1137 = vmatprep.subr.bf16.mxu0 0
      %1138 = vmatpush1.bf16.msra.mxu0 0
      %1139 = vmatprep.subr.bf16.mxu0 0
      %1140 = vmatpush1.bf16.msra.mxu0 0
      %1141 = vmatprep.subr.bf16.mxu0 0
      %1142 = vmatpush1.bf16.msra.mxu0 0
      %1143 = vmatprep.subr.bf16.mxu0 0
      %1144 = vmatpush1.bf16.msra.mxu0 0
      %1145 = vmatprep.subr.bf16.mxu0 0
      %1146 = vmatpush1.bf16.msra.mxu0 0
      %1147 = vmatprep.subr.bf16.mxu0 0
      %1148 = vmatpush1.bf16.msra.mxu0 0
      %1149 = vmatprep.subr.bf16.mxu0 0
      %1150 = vmatpush1.bf16.msra.mxu0 0
      %1151 = vmatprep.subr.bf16.mxu0 0
      %1152 = vmatpush1.bf16.msra.mxu0 0
      %1153 = vmatprep.subr.bf16.mxu0 0
      %1154 = vmatpush1.bf16.msra.mxu0 0
      %1155 = vmatprep.subr.bf16.mxu0 0
      %1156 = vmatpush1.bf16.msra.mxu0 0
      %1157 = vmatprep.mubr.bf16.mxu0 0
      %1158 = vmatmul.mubr.bf16.gmra.mrb[0].mxu0 %v1098
      %v1159 = vpop.f32.mrb[0].mxu0
      %v1160 = vadd.f32 %v1095, %v1159
      %v1161 = vpop.f32.mrb[0].mxu0
      %v1162 = vpop.f32.mrb[0].mxu0
      %v1163 = vadd.f32 %v1095, %v1162
      %v1164 = vpop.f32.mrb[0].mxu0
      %1165 = vmatprep.mubr.bf16.mxu0 0
      %1166 = vmatmul.mubr.bf16.gmra.mrb[0].mxu0 %v1101
      %v1167 = vpop.f32.mrb[0].mxu0
      %v1168 = vadd.f32 %v1095, %v1167
      %v1169 = vpop.f32.mrb[0].mxu0
      %v1170 = vpop.f32.mrb[0].mxu0
      %v1171 = vadd.f32 %v1095, %v1170
      %v1172 = vpop.f32.mrb[0].mxu0
      %1173 = vmatprep.mubr.bf16.mxu0 0
      %1174 = vmatmul.mubr.bf16.gmra.mrb[0].mxu0 %v1104
      %v1175 = vpop.f32.mrb[0].mxu0
      %v1176 = vadd.f32 %v1095, %v1175
      %v1177 = vpop.f32.mrb[0].mxu0
      %v1178 = vpop.f32.mrb[0].mxu0
      %v1179 = vadd.f32 %v1095, %v1178
      %v1180 = vpop.f32.mrb[0].mxu0
      %1181 = vmatprep.mubr.bf16.mxu0 0
      %1182 = vmatmul.mubr.bf16.gmra.mrb[0].mxu0 %v1107
      %v1183 = vpop.f32.mrb[0].mxu0
      %v1184 = vadd.f32 %v1095, %v1183
      %v1185 = vpop.f32.mrb[0].mxu0
      %v1186 = vpop.f32.mrb[0].mxu0
      %v1187 = vadd.f32 %v1095, %v1186
      %v1188 = vpop.f32.mrb[0].mxu0
      %1189 = vmatprep.mubr.bf16.mxu0 0
      %1190 = vmatmul.mubr.bf16.gmra.mrb[0].mxu0 %v1110
      %v1191 = vpop.f32.mrb[0].mxu0
      %v1192 = vadd.f32 %v1095, %v1191
      %v1193 = vpop.f32.mrb[0].mxu0
      %v1194 = vpop.f32.mrb[0].mxu0
      %v1195 = vadd.f32 %v1095, %v1194
      %v1196 = vpop.f32.mrb[0].mxu0
      %1197 = vmatprep.mubr.bf16.mxu0 0
      %1198 = vmatmul.mubr.bf16.gmra.mrb[0].mxu0 %v1113
      %v1199 = vpop.f32.mrb[0].mxu0
      %v1200 = vadd.f32 %v1095, %v1199
      %v1201 = vpop.f32.mrb[0].mxu0
      %v1202 = vpop.f32.mrb[0].mxu0
      %v1203 = vadd.f32 %v1095, %v1202
      %v1204 = vpop.f32.mrb[0].mxu0
      %1205 = vmatprep.mubr.bf16.mxu0 0
      %1206 = vmatmul.mubr.bf16.gmra.mrb[0].mxu0 %v1116
      %v1207 = vpop.f32.mrb[0].mxu0
      %v1208 = vadd.f32 %v1095, %v1207
      %v1209 = vpop.f32.mrb[0].mxu0
      %v1210 = vpop.f32.mrb[0].mxu0
      %v1211 = vadd.f32 %v1095, %v1210
      %v1212 = vpop.f32.mrb[0].mxu0
      %1213 = vmatprep.mubr.bf16.mxu0 0
      %1214 = vmatmul.mubr.bf16.gmra.mrb[0].mxu0 %v1119
      %v1215 = vpop.f32.mrb[0].mxu0
      %v1216 = vadd.f32 %v1095, %v1215
      %v1217 = vpop.f32.mrb[0].mxu0
      %v1218 = vpop.f32.mrb[0].mxu0
      %v1219 = vadd.f32 %v1095, %v1218
      %v1220 = vpop.f32.mrb[0].mxu0
      %1221 = vdwg.mxu0
      %s1222 = scalar_lea.vmem %s237, %s620
      %v1223 = vld [vmem:[%s1222] sm:$0xff]
      %v1224 = vld [vmem:[%s1222 + $0x8] sm:$0xff]
      %v1225 = vld [vmem:[%s1222 + $0x10] sm:$0xff]
      %v1226 = vld [vmem:[%s1222 + $0x18] sm:$0xff]
      %v1227 = vld [vmem:[%s1222 + $0x20] sm:$0xff]
      %v1228 = vld [vmem:[%s1222 + $0x28] sm:$0xff]
      %v1229 = vld [vmem:[%s1222 + $0x30] sm:$0xff]
      %v1230 = vld [vmem:[%s1222 + $0x38] sm:$0xff]
      %v1231 = vld [vmem:[%s1222 + $0x40] sm:$0xff]
      %v1232 = vld [vmem:[%s1222 + $0x48] sm:$0xff]
      %v1233 = vld [vmem:[%s1222 + $0x50] sm:$0xff]
      %v1234 = vld [vmem:[%s1222 + $0x58] sm:$0xff]
      %v1235 = vld [vmem:[%s1222 + $0x60] sm:$0xff]
      %v1236 = vld [vmem:[%s1222 + $0x68] sm:$0xff]
      %v1237 = vld [vmem:[%s1222 + $0x70] sm:$0xff]
      %v1238 = vld [vmem:[%s1222 + $0x78] sm:$0xff]
      %v1239 = vadd.f32 %v1160, %v1223
      %v1240 = vadd.f32 %v1163, %v1224
      %v1241 = vadd.f32 %v1168, %v1225
      %v1242 = vadd.f32 %v1171, %v1226
      %v1243 = vadd.f32 %v1176, %v1227
      %v1244 = vadd.f32 %v1179, %v1228
      %v1245 = vadd.f32 %v1184, %v1229
      %v1246 = vadd.f32 %v1187, %v1230
      %v1247 = vadd.f32 %v1192, %v1231
      %v1248 = vadd.f32 %v1195, %v1232
      %v1249 = vadd.f32 %v1200, %v1233
      %v1250 = vadd.f32 %v1203, %v1234
      %v1251 = vadd.f32 %v1208, %v1235
      %v1252 = vadd.f32 %v1211, %v1236
      %v1253 = vadd.f32 %v1216, %v1237
      %v1254 = vadd.f32 %v1219, %v1238
      %vm1255 = vcmask 31744
      %1256 = vst.msk [vmem:[%s246] sm:$0xff] %vm1255, %v1239
      %1257 = vst.msk [vmem:[%s246 + $0x8] sm:$0xff] %vm1255, %v1240
      %1258 = vst.msk [vmem:[%s246 + $0x10] sm:$0xff] %vm1255, %v1241
      %1259 = vst.msk [vmem:[%s246 + $0x18] sm:$0xff] %vm1255, %v1242
      %1260 = vst.msk [vmem:[%s246 + $0x20] sm:$0xff] %vm1255, %v1243
      %1261 = vst.msk [vmem:[%s246 + $0x28] sm:$0xff] %vm1255, %v1244
      %1262 = vst.msk [vmem:[%s246 + $0x30] sm:$0xff] %vm1255, %v1245
      %1263 = vst.msk [vmem:[%s246 + $0x38] sm:$0xff] %vm1255, %v1246
      %1264 = vst.msk [vmem:[%s246 + $0x40] sm:$0xff] %vm1255, %v1247
      %1265 = vst.msk [vmem:[%s246 + $0x48] sm:$0xff] %vm1255, %v1248
      %1266 = vst.msk [vmem:[%s246 + $0x50] sm:$0xff] %vm1255, %v1249
      %1267 = vst.msk [vmem:[%s246 + $0x58] sm:$0xff] %vm1255, %v1250
      %1268 = vst.msk [vmem:[%s246 + $0x60] sm:$0xff] %vm1255, %v1251
      %1269 = vst.msk [vmem:[%s246 + $0x68] sm:$0xff] %vm1255, %v1252
      %1270 = vst.msk [vmem:[%s246 + $0x70] sm:$0xff] %vm1255, %v1253
      %1271 = vst.msk [vmem:[%s246 + $0x78] sm:$0xff] %vm1255, %v1254
      %s1272 = smul.u32 16, %s21
      %p1273 = scmp.lt.s32.totalorder %s20, 1
      %s1274 = scalar_select %p1273, %s20, 1
      %p1275 = scmp.lt.s32.totalorder %s1272, 31
      %s1276 = scalar_select %p1275, %s1272, 31
      %s1277 = smul.addr %s1274, 32
      %s1278 = sadd.s32 %s1276, %s1277
      %s1279 = smul.addr %s1278, 8
      %s1280 = scalar_lea.vmem %s5, %s1279
      // Predicated region
      $region45: #{tpu_custom_call.1} parent=39 // pred_check
        %p1281 = pneg %p158
      $region46: #{tpu_custom_call.1} parent=39 // pred_check_branch
        %1283 = sbr.rel (%p1281) target = $region48
      $region47: #{tpu_custom_call.1} parent=39 // pred_region
        %s1284 = smul.u32 16, %s21
      $region48: #{tpu_custom_call.1} parent=39 // pred_fallthru
        _
    $region40: #{tpu_custom_call.1} parent=5 // pred_fallthru
      _
    %p1285 = scmp.le.s32.totalorder 2, %s11
    // Predicated region
    $region49: #{tpu_custom_call.1} parent=5 // pred_check
      %p1286 = pneg %p1285
    $region50: #{tpu_custom_call.1} parent=5 // pred_check_branch
      %1288 = sbr.rel (%p1286) target = $region52
    $region51: #{tpu_custom_call.1} parent=5 // pred_region
      %s1289 = ssub.s32 %s11, 2
      // Predicated region
      $region53: #{tpu_custom_call.1} parent=51 // pred_check
        %p1290 = pneg %p164
      $region54: #{tpu_custom_call.1} parent=51 // pred_check_branch
        %1292 = sbr.rel (%p1290) target = $region56
      $region55: #{tpu_custom_call.1} parent=51 // pred_region
        %s1293 = smul.u32 16, %s23
        %p1294 = scmp.lt.s32.totalorder %s22, 1
        %s1295 = scalar_select %p1294, %s22, 1
        %p1296 = scmp.lt.s32.totalorder %s1293, 31
        %s1297 = scalar_select %p1296, %s1293, 31
        %s1298 = smul.addr %s1295, 32
        %s1299 = sadd.s32 %s1297, %s1298
        %s1300 = smul.addr %s1299, 8
        %s1301 = scalar_lea.vmem %s5, %s1300
      $region56: #{tpu_custom_call.1} parent=51 // pred_fallthru
        _
    $region52: #{tpu_custom_call.1} parent=5 // pred_fallthru
      _
  $region6: #{tpu_custom_call.1} parent=0 // loop_footer
    %s15 = sadd.s32 1, %s11
  $region7: #{tpu_custom_call.1} parent=0 // loop_footer_branch
    %10 = sbr.rel target = $region3
  $region8: #{tpu_custom_call.1} parent=0 // loop_exit
    _

</llo_original>
